<compile_context>
chip_gen: v7x
topology: tpu7x:2x2x1
jax: 0.10.0
libtpu: 0.0.40
codegen_flags: <defaults>
</compile_context>

<pallas_src>
import functools

import jax
import jax.numpy as jnp
from jax.experimental import pallas as pl
from jax.experimental.pallas import tpu as pltpu


def _rel_pos_kernel(q_ref, w_ref, ids_ref, o_ref, *, num_pos_ids, lanes):
    """Single-shot kernel: one fused MXU matmul + masked-select gather.

    q_ref   : (Sq, B*H*Dh)          fused query
    w_ref   : (B*H*Dh, P*B*H*Sk)    block-diagonal, k-replicated weight
    ids_ref : (Sq, B*H*Sk)          int32, lane-dense ids (pre-broadcast over H)
    o_ref   : (Sq, B*H*Sk)          lane-dense output
    """
    # One MXU call for all batches/heads; contraction on (last, first) axes,
    # no explicit transpose feeding the MXU.
    q_rel = jax.lax.dot_general(
        q_ref[...], w_ref[...],
        dimension_numbers=(((1,), (0,)), ((), ())),
        preferred_element_type=jnp.float32)            # (Sq, P*lanes)

    ids = ids_ref[...]                                  # (Sq, lanes) int32

    # Gather along the position axis.  For each p the candidate values are a
    # static, 128-lane-aligned slab of q_rel (already replicated over Sk by the
    # weight construction), so each step is just compare + select on 2 vregs.
    out = jnp.zeros(ids.shape, jnp.float32)
    for p in range(num_pos_ids):
        out = jnp.where(ids == p, q_rel[:, p * lanes:(p + 1) * lanes], out)

    o_ref[...] = out.astype(o_ref.dtype)


def relative_position_forward(query_proj, rel_token_ids, rel_embed_weight,
                              num_heads):
    """Pallas wrapper reproducing RelativePositionLayer.forward.

    Args:
      query_proj      : (B*H, Sq, Dh) float32
      rel_token_ids   : (B, Sq, Sk)   integer
      rel_embed_weight: (P, E)        float32, E = H * Dh
      num_heads       : H
    Returns:
      (B*H, Sq, Sk) float32
    """
    P, E = rel_embed_weight.shape
    B, Sq, Sk = rel_token_ids.shape
    H = num_heads
    Dh = E // H
    BH = B * H
    lanes = BH * Sk
    assert query_proj.shape == (BH, Sq, Dh)

    dtype = query_proj.dtype

    # ---- wrapper-side layout plumbing (tiny arrays, pure XLA) ---------------
    # Per-head table: head h uses columns [d*H + h] of the (P, E) weight,
    # matching the PyTorch view(P, Dh, H).permute(...).
    w = jnp.transpose(rel_embed_weight.reshape(P, Dh, H), (2, 0, 1))  # (H,P,Dh)

    # Fused query: q3[q, (b*H+h)*Dh + d] = query[b, h, q, d]
    q4 = query_proj.reshape(B, H, Sq, Dh)
    q3 = jnp.transpose(q4, (2, 0, 1, 3)).reshape(Sq, BH * Dh)

    # Block-diagonal (over (b,h)) weight, replicated along Sk so the MXU emits
    # Q_rel already in the k-replicated lane layout:
    #   W_all[(bh)*Dh + d, p*(BH*Sk) + (bh2)*Sk + k] = (bh == bh2) * w[h, p, d]
    w_bh = jnp.tile(w, (B, 1, 1))                                    # (BH,P,Dh)
    eye_bh = jnp.eye(BH, dtype=dtype)                                # (BH,BH)
    w6 = (w_bh.transpose(0, 2, 1)[:, :, :, None, None] *             # (BH,Dh,P,1,1)
          eye_bh[:, None, None, :, None])                            # (BH,1,1,BH,1)
    w_all = jnp.broadcast_to(
        w6, (BH, Dh, P, BH, Sk)).reshape(BH * Dh, P * BH * Sk).astype(dtype)

    # Lane-dense ids, broadcast over heads:
    #   ids_ld[q, (b*H+h)*Sk + k] = rel_token_ids[b, q, k]
    ids_b = jnp.broadcast_to(
        rel_token_ids.astype(jnp.int32)[:, None, :, :], (B, H, Sq, Sk))
    ids_ld = jnp.transpose(ids_b, (2, 0, 1, 3)).reshape(Sq, lanes)

    kernel = functools.partial(_rel_pos_kernel, num_pos_ids=P, lanes=lanes)

    # Single invocation (no grid): everything lives in VMEM for the whole call
    # (weight slab = BH*Dh x P*BH*Sk f32 = 256 KB at these shapes).
    # TODO(synk): for production-scale Sq/Sk, tile Sq with a 1-D grid and set
    # vmem_limit_bytes explicitly (v7x has only 64 MiB of physical VMEM).
    vmem = pl.BlockSpec(memory_space=pltpu.MemorySpace.VMEM)
    out_ld = pl.pallas_call(
        kernel,
        out_shape=jax.ShapeDtypeStruct((Sq, lanes), dtype),
        in_specs=[vmem, vmem, vmem],
        out_specs=vmem,
    )(q3, w_all, ids_ld)

    # (Sq, B*H*Sk) -> (B*H, Sq, Sk)
    out = jnp.transpose(out_ld.reshape(Sq, B, H, Sk), (1, 2, 0, 3))
    return out.reshape(BH, Sq, Sk)


def _reference(query_proj, rel_token_ids, rel_embed_weight, num_heads):
    """Pure-JAX reference mirroring the PyTorch forward (for verification)."""
    P, E = rel_embed_weight.shape
    B, Sq, Sk = rel_token_ids.shape
    H = num_heads
    Dh = E // H
    w = jnp.transpose(rel_embed_weight.reshape(P, Dh, H), (2, 0, 1))  # (H,P,Dh)
    q = query_proj.reshape(B, H, Sq, Dh)
    q_rel = jnp.einsum("bhqd,hpd->bhqp", q, w)                        # (B,H,Sq,P)
    idx = jnp.broadcast_to(rel_token_ids[:, None, :, :], (B, H, Sq, Sk))
    ref = jnp.take_along_axis(q_rel, idx.astype(jnp.int32), axis=-1)
    return ref.reshape(B * H, Sq, Sk)


if __name__ == "__main__":
    # Module hyper-parameters.
    num_heads = 4
    rel_pos_max_distance = 3
    embed_dim = 32
    directed_relative_position = True
    padding_idx = 0

    num_pos_ids = (2 * rel_pos_max_distance + 1
                   if directed_relative_position
                   else rel_pos_max_distance + 1) + 1          # = 8
    head_dim = embed_dim // num_heads                          # = 8

    # Forward-pass shapes.
    B, Sq, Sk = 2, 16, 16

    key = jax.random.PRNGKey(0)
    k_w, k_q, k_ids = jax.random.split(key, 3)

    # Deterministic "nn.Embedding" weight: N(0,1) with the padding row zeroed.
    rel_embed_weight = jax.random.normal(
        k_w, (num_pos_ids, embed_dim), dtype=jnp.float32)
    rel_embed_weight = rel_embed_weight.at[padding_idx].set(0.0)

    query_proj = jax.random.normal(
        k_q, (B * num_heads, Sq, head_dim), dtype=jnp.float32)
    rel_token_ids = jax.random.randint(
        k_ids, (B, Sq, Sk), 0, num_pos_ids, dtype=jnp.int32)

    out = relative_position_forward(
        query_proj, rel_token_ids, rel_embed_weight, num_heads)
    out = jax.block_until_ready(out)

    ref = _reference(query_proj, rel_token_ids, rel_embed_weight, num_heads)
    assert out.shape == (B * num_heads, Sq, Sk)
    assert jnp.allclose(out, ref, atol=1e-5, rtol=1e-5)

    print("KERNEL_OK")
</pallas_src>

<mosaic_0001>
module attributes {stable_mosaic.version = 11 : i64} {
  func.func @_rel_pos_kernel(%arg0: memref<16x64xf32, #tpu.memory_space<vmem>>, %arg1: memref<64x1024xf32, #tpu.memory_space<vmem>>, %arg2: memref<16x128xi32, #tpu.memory_space<vmem>>, %arg3: memref<16x128xf32, #tpu.memory_space<vmem>>) attributes {dimension_semantics = [], scalar_prefetch = 0 : i64, scratch_operands = 0 : i64, tpu.core_type = #tpu.core_type<tc>} {
    %c0 = arith.constant 0 : index
    %c0_0 = arith.constant 0 : index
    %0 = vector.load %arg0[%c0, %c0_0] : memref<16x64xf32, #tpu.memory_space<vmem>>, vector<16x64xf32>
    %c0_1 = arith.constant 0 : index
    %c0_2 = arith.constant 0 : index
    %1 = vector.load %arg1[%c0_1, %c0_2] : memref<64x1024xf32, #tpu.memory_space<vmem>>, vector<64x1024xf32>
    %cst = arith.constant dense<0.000000e+00> : vector<16x1024xf32>
    %2 = tpu.matmul %0, %1, %cst {dimension_numbers = #tpu.dot_dimension_numbers<[1], [0], [0], [1], [0, 0, 1, 1], [], []>} : vector<16x64xf32>, vector<64x1024xf32>, vector<16x1024xf32> -> vector<16x1024xf32>
    %c0_3 = arith.constant 0 : index
    %c0_4 = arith.constant 0 : index
    %3 = vector.load %arg2[%c0_3, %c0_4] : memref<16x128xi32, #tpu.memory_space<vmem>>, vector<16x128xi32>
    %cst_5 = arith.constant 0.000000e+00 : f32
    %4 = vector.broadcast %cst_5 : f32 to vector<16x128xf32>
    %c0_i32 = arith.constant 0 : i32
    %5 = vector.broadcast %c0_i32 : i32 to vector<16x128xi32>
    %6 = arith.cmpi eq, %3, %5 : vector<16x128xi32>
    %7 = vector.extract_strided_slice %2 {offsets = [0, 0], sizes = [16, 128], strides = [1, 1]} : vector<16x1024xf32> to vector<16x128xf32>
    %8 = arith.select %6, %7, %4 : vector<16x128xi1>, vector<16x128xf32>
    %c1_i32 = arith.constant 1 : i32
    %9 = vector.broadcast %c1_i32 : i32 to vector<16x128xi32>
    %10 = arith.cmpi eq, %3, %9 : vector<16x128xi32>
    %11 = vector.extract_strided_slice %2 {offsets = [0, 128], sizes = [16, 128], strides = [1, 1]} : vector<16x1024xf32> to vector<16x128xf32>
    %12 = arith.select %10, %11, %8 : vector<16x128xi1>, vector<16x128xf32>
    %c2_i32 = arith.constant 2 : i32
    %13 = vector.broadcast %c2_i32 : i32 to vector<16x128xi32>
    %14 = arith.cmpi eq, %3, %13 : vector<16x128xi32>
    %15 = vector.extract_strided_slice %2 {offsets = [0, 256], sizes = [16, 128], strides = [1, 1]} : vector<16x1024xf32> to vector<16x128xf32>
    %16 = arith.select %14, %15, %12 : vector<16x128xi1>, vector<16x128xf32>
    %c3_i32 = arith.constant 3 : i32
    %17 = vector.broadcast %c3_i32 : i32 to vector<16x128xi32>
    %18 = arith.cmpi eq, %3, %17 : vector<16x128xi32>
    %19 = vector.extract_strided_slice %2 {offsets = [0, 384], sizes = [16, 128], strides = [1, 1]} : vector<16x1024xf32> to vector<16x128xf32>
    %20 = arith.select %18, %19, %16 : vector<16x128xi1>, vector<16x128xf32>
    %c4_i32 = arith.constant 4 : i32
    %21 = vector.broadcast %c4_i32 : i32 to vector<16x128xi32>
    %22 = arith.cmpi eq, %3, %21 : vector<16x128xi32>
    %23 = vector.extract_strided_slice %2 {offsets = [0, 512], sizes = [16, 128], strides = [1, 1]} : vector<16x1024xf32> to vector<16x128xf32>
    %24 = arith.select %22, %23, %20 : vector<16x128xi1>, vector<16x128xf32>
    %c5_i32 = arith.constant 5 : i32
    %25 = vector.broadcast %c5_i32 : i32 to vector<16x128xi32>
    %26 = arith.cmpi eq, %3, %25 : vector<16x128xi32>
    %27 = vector.extract_strided_slice %2 {offsets = [0, 640], sizes = [16, 128], strides = [1, 1]} : vector<16x1024xf32> to vector<16x128xf32>
    %28 = arith.select %26, %27, %24 : vector<16x128xi1>, vector<16x128xf32>
    %c6_i32 = arith.constant 6 : i32
    %29 = vector.broadcast %c6_i32 : i32 to vector<16x128xi32>
    %30 = arith.cmpi eq, %3, %29 : vector<16x128xi32>
    %31 = vector.extract_strided_slice %2 {offsets = [0, 768], sizes = [16, 128], strides = [1, 1]} : vector<16x1024xf32> to vector<16x128xf32>
    %32 = arith.select %30, %31, %28 : vector<16x128xi1>, vector<16x128xf32>
    %c7_i32 = arith.constant 7 : i32
    %33 = vector.broadcast %c7_i32 : i32 to vector<16x128xi32>
    %34 = arith.cmpi eq, %3, %33 : vector<16x128xi32>
    %35 = vector.extract_strided_slice %2 {offsets = [0, 896], sizes = [16, 128], strides = [1, 1]} : vector<16x1024xf32> to vector<16x128xf32>
    %36 = arith.select %34, %35, %32 : vector<16x128xi1>, vector<16x128xf32>
    %c0_6 = arith.constant 0 : index
    %c0_7 = arith.constant 0 : index
    %37 = vector.load %arg3[%c0_6, %c0_7] : memref<16x128xf32, #tpu.memory_space<vmem>>, vector<16x128xf32>
    tpu.vector_store %arg3[%c0_6, %c0_7], %36 {strides = array<i32>} : memref<16x128xf32, #tpu.memory_space<vmem>>, vector<16x128xf32>,
    return
  }
}

</mosaic_0001>

<llo_original>
// kernel: tpu_custom_call.1
$region0: #{tpu_custom_call.1}
  #allocation0 [shape = 'u32[]', space=smem, size = 0x4, offset = 0x4, fixed_abs, tag = 'smem constant byte address 0x4 - core index']
  #allocation1 [shape = 'u32[144,128]{1,0:T(1,128)}', space=vmem, size = 0x12000, scoped, tag = 'internal scratch']
  %s0 = inlined_call_operand.hbm [shape: f32[16,64], index: 0, kind: input, shape index: {}]
  %s1 = inlined_call_operand.hbm [shape: f32[64,1024], index: 1, kind: input, shape index: {}]
  %s2 = inlined_call_operand.hbm [shape: s32[16,128], index: 2, kind: input, shape index: {}]
  %s3 = inlined_call_operand.hbm [shape: f32[16,128], index: 3, kind: output, shape index: {}]
  %s4 = sld [smem:[#allocation0]]
  $region34: #{tpu_custom_call.1} parent=0
    _
  %s6 = ssub.s32 1, %s4
  %s7 = scalar_select 0, %s6, %s4
  $region1: #{tpu_custom_call.1} parent=0
    #allocation2 [shape = 'u8[8192]{0}', space=vmem, size = 0x2000, scoped, tag = 'input window, operand 0, single buffered']
    #allocation3 [shape = 's32[1]{0}', space=sflag, size = 0x4, scoped, tag = 'scoped memory for tpu_custom_call.1']
    #allocation4 [shape = 's32[1]{0}', space=sflag, size = 0x4, scoped, tag = 'scoped memory for tpu_custom_call.1']
    #allocation5 [shape = 'u8[262144]{0}', space=vmem, size = 0x40000, scoped, tag = 'input window, operand 1, single buffered']
    #allocation6 [shape = 's32[1]{0}', space=sflag, size = 0x4, scoped, tag = 'scoped memory for tpu_custom_call.1']
    #allocation7 [shape = 'u8[8192]{0}', space=vmem, size = 0x2000, scoped, tag = 'input window, operand 2, single buffered']
    #allocation8 [shape = 'u8[8192]{0}', space=vmem, size = 0x2000, scoped, tag = 'output window, operand 0, single buffered']
    %8 = vsyncpa [#allocation3], 0
    %9 = vsyncpa [#allocation6], 0
    %10 = vsyncpa [#allocation4], 0
    // Predicated region
    $region2: #{tpu_custom_call.1} parent=1 // pred_check
      _
    $region3: #{tpu_custom_call.1} parent=1 // pred_check_branch
      %12 = sbr.rel (0) target = $region5
    $region4: #{tpu_custom_call.1} parent=1 // pred_region
      %s14 = ssub.s32 256, 256
      %15 = vsyncadd [#allocation3], %s14
      %s16 = sshll.u32 [#allocation2], 4
      %s17 = int_to_ptr.vmem [resolvable:$true] %s16
      %22 = dma.hbm_to_vmem [thread:$0]  %s0, 256, %s17, [#allocation3], 128, 128, 8
    $region5: #{tpu_custom_call.1} parent=1 // pred_fallthru
      _
    // Predicated region
    $region6: #{tpu_custom_call.1} parent=1 // pred_check
      _
    $region7: #{tpu_custom_call.1} parent=1 // pred_check_branch
      %24 = sbr.rel (0) target = $region9
    $region8: #{tpu_custom_call.1} parent=1 // pred_region
      %s26 = ssub.s32 8192, 8192
      %27 = vsyncadd [#allocation6], %s26
      %s28 = sshll.u32 [#allocation5], 4
      %s29 = int_to_ptr.vmem [resolvable:$true] %s28
      %34 = dma.hbm_to_vmem [thread:$0]  %s1, 8192, %s29, [#allocation6], 1024, 1024, 64
    $region9: #{tpu_custom_call.1} parent=1 // pred_fallthru
      _
    // Predicated region
    $region10: #{tpu_custom_call.1} parent=1 // pred_check
      _
    $region11: #{tpu_custom_call.1} parent=1 // pred_check_branch
      %36 = sbr.rel (0) target = $region13
    $region12: #{tpu_custom_call.1} parent=1 // pred_region
      %s38 = ssub.s32 256, 256
      %39 = vsyncadd [#allocation6], %s38
      %s40 = sshll.u32 [#allocation7], 4
      %s41 = int_to_ptr.vmem [resolvable:$true] %s40
      %46 = dma.hbm_to_vmem [thread:$0]  %s2, 256, %s41, [#allocation6], 128, 128, 8
    $region13: #{tpu_custom_call.1} parent=1 // pred_fallthru
      _
    // Predicated region
    $region14: #{tpu_custom_call.1} parent=1 // pred_check
      _
    $region15: #{tpu_custom_call.1} parent=1 // pred_check_branch
      %48 = sbr.rel (0) target = $region17
    $region16: #{tpu_custom_call.1} parent=1 // pred_region
      %49 = dma.done [#allocation3], 256
    $region17: #{tpu_custom_call.1} parent=1 // pred_fallthru
      _
    // Predicated region
    $region18: #{tpu_custom_call.1} parent=1 // pred_check
      _
    $region19: #{tpu_custom_call.1} parent=1 // pred_check_branch
      %51 = sbr.rel (0) target = $region21
    $region20: #{tpu_custom_call.1} parent=1 // pred_region
      %52 = dma.done [#allocation6], 8192
    $region21: #{tpu_custom_call.1} parent=1 // pred_fallthru
      _
    // Predicated region
    $region22: #{tpu_custom_call.1} parent=1 // pred_check
      _
    $region23: #{tpu_custom_call.1} parent=1 // pred_check_branch
      %54 = sbr.rel (0) target = $region25
    $region24: #{tpu_custom_call.1} parent=1 // pred_region
      %55 = dma.done [#allocation6], 256
    $region25: #{tpu_custom_call.1} parent=1 // pred_fallthru
      _
    %v56 = vld [vmem:[#allocation2] sm:$0xff]
    %v57 = vld [vmem:[#allocation2 + $0x8] sm:$0xff]
    %v58 = vld [vmem:[#allocation5] sm:$0xff]
    %v59 = vld [vmem:[#allocation5 + $0x8] sm:$0xff]
    %v60 = vld [vmem:[#allocation5 + $0x10] sm:$0xff]
    %v61 = vld [vmem:[#allocation5 + $0x18] sm:$0xff]
    %v62 = vld [vmem:[#allocation5 + $0x20] sm:$0xff]
    %v63 = vld [vmem:[#allocation5 + $0x28] sm:$0xff]
    %v64 = vld [vmem:[#allocation5 + $0x30] sm:$0xff]
    %v65 = vld [vmem:[#allocation5 + $0x38] sm:$0xff]
    %v66 = vld [vmem:[#allocation5 + $0x40] sm:$0xff]
    %v67 = vld [vmem:[#allocation5 + $0x48] sm:$0xff]
    %v68 = vld [vmem:[#allocation5 + $0x50] sm:$0xff]
    %v69 = vld [vmem:[#allocation5 + $0x58] sm:$0xff]
    %v70 = vld [vmem:[#allocation5 + $0x60] sm:$0xff]
    %v71 = vld [vmem:[#allocation5 + $0x68] sm:$0xff]
    %v72 = vld [vmem:[#allocation5 + $0x70] sm:$0xff]
    %v73 = vld [vmem:[#allocation5 + $0x78] sm:$0xff]
    %v74 = vld [vmem:[#allocation5 + $0x80] sm:$0xff]
    %v75 = vld [vmem:[#allocation5 + $0x88] sm:$0xff]
    %v76 = vld [vmem:[#allocation5 + $0x90] sm:$0xff]
    %v77 = vld [vmem:[#allocation5 + $0x98] sm:$0xff]
    %v78 = vld [vmem:[#allocation5 + $0xa0] sm:$0xff]
    %v79 = vld [vmem:[#allocation5 + $0xa8] sm:$0xff]
    %v80 = vld [vmem:[#allocation5 + $0xb0] sm:$0xff]
    %v81 = vld [vmem:[#allocation5 + $0xb8] sm:$0xff]
    %v82 = vld [vmem:[#allocation5 + $0xc0] sm:$0xff]
    %v83 = vld [vmem:[#allocation5 + $0xc8] sm:$0xff]
    %v84 = vld [vmem:[#allocation5 + $0xd0] sm:$0xff]
    %v85 = vld [vmem:[#allocation5 + $0xd8] sm:$0xff]
    %v86 = vld [vmem:[#allocation5 + $0xe0] sm:$0xff]
    %v87 = vld [vmem:[#allocation5 + $0xe8] sm:$0xff]
    %v88 = vld [vmem:[#allocation5 + $0xf0] sm:$0xff]
    %v89 = vld [vmem:[#allocation5 + $0xf8] sm:$0xff]
    %v90 = vld [vmem:[#allocation5 + $0x100] sm:$0xff]
    %v91 = vld [vmem:[#allocation5 + $0x108] sm:$0xff]
    %v92 = vld [vmem:[#allocation5 + $0x110] sm:$0xff]
    %v93 = vld [vmem:[#allocation5 + $0x118] sm:$0xff]
    %v94 = vld [vmem:[#allocation5 + $0x120] sm:$0xff]
    %v95 = vld [vmem:[#allocation5 + $0x128] sm:$0xff]
    %v96 = vld [vmem:[#allocation5 + $0x130] sm:$0xff]
    %v97 = vld [vmem:[#allocation5 + $0x138] sm:$0xff]
    %v98 = vld [vmem:[#allocation5 + $0x140] sm:$0xff]
    %v99 = vld [vmem:[#allocation5 + $0x148] sm:$0xff]
    %v100 = vld [vmem:[#allocation5 + $0x150] sm:$0xff]
    %v101 = vld [vmem:[#allocation5 + $0x158] sm:$0xff]
    %v102 = vld [vmem:[#allocation5 + $0x160] sm:$0xff]
    %v103 = vld [vmem:[#allocation5 + $0x168] sm:$0xff]
    %v104 = vld [vmem:[#allocation5 + $0x170] sm:$0xff]
    %v105 = vld [vmem:[#allocation5 + $0x178] sm:$0xff]
    %v106 = vld [vmem:[#allocation5 + $0x180] sm:$0xff]
    %v107 = vld [vmem:[#allocation5 + $0x188] sm:$0xff]
    %v108 = vld [vmem:[#allocation5 + $0x190] sm:$0xff]
    %v109 = vld [vmem:[#allocation5 + $0x198] sm:$0xff]
    %v110 = vld [vmem:[#allocation5 + $0x1a0] sm:$0xff]
    %v111 = vld [vmem:[#allocation5 + $0x1a8] sm:$0xff]
    %v112 = vld [vmem:[#allocation5 + $0x1b0] sm:$0xff]
    %v113 = vld [vmem:[#allocation5 + $0x1b8] sm:$0xff]
    %v114 = vld [vmem:[#allocation5 + $0x1c0] sm:$0xff]
    %v115 = vld [vmem:[#allocation5 + $0x1c8] sm:$0xff]
    %v116 = vld [vmem:[#allocation5 + $0x1d0] sm:$0xff]
    %v117 = vld [vmem:[#allocation5 + $0x1d8] sm:$0xff]
    %v118 = vld [vmem:[#allocation5 + $0x1e0] sm:$0xff]
    %v119 = vld [vmem:[#allocation5 + $0x1e8] sm:$0xff]
    %v120 = vld [vmem:[#allocation5 + $0x1f0] sm:$0xff]
    %v121 = vld [vmem:[#allocation5 + $0x1f8] sm:$0xff]
    %vm122 = vcmask 523264
    %v124 = vsel %vm122, %v56, 0
    %v127 = vsel %vm122, %v57, 0
    %129 = vmatprep.subr.mxu0 %v59
    %130 = vmatpush1.msra.mxu0 %v58
    %131 = vmatprep.subr.mxu0 %v67
    %132 = vmatpush1.msra.mxu0 %v66
    %133 = vmatprep.subr.mxu0 %v75
    %134 = vmatpush1.msra.mxu0 %v74
    %135 = vmatprep.subr.mxu0 %v83
    %136 = vmatpush1.msra.mxu0 %v82
    %137 = vmatprep.subr.mxu0 %v91
    %138 = vmatpush1.msra.mxu0 %v90
    %139 = vmatprep.subr.mxu0 %v99
    %140 = vmatpush1.msra.mxu0 %v98
    %141 = vmatprep.subr.mxu0 %v107
    %142 = vmatpush1.msra.mxu0 %v106
    %143 = vmatprep.subr.mxu0 %v115
    %144 = vmatpush1.msra.mxu0 %v114
    %145 = vmatprep.subr.mxu0 0.0
    %146 = vmatpush1.msra.mxu0 0.0
    %147 = vmatprep.subr.mxu0 0.0
    %148 = vmatpush1.msra.mxu0 0.0
    %149 = vmatprep.subr.mxu0 0.0
    %150 = vmatpush1.msra.mxu0 0.0
    %151 = vmatprep.subr.mxu0 0.0
    %152 = vmatpush1.msra.mxu0 0.0
    %153 = vmatprep.subr.mxu0 0.0
    %154 = vmatpush1.msra.mxu0 0.0
    %155 = vmatprep.subr.mxu0 0.0
    %156 = vmatpush1.msra.mxu0 0.0
    %157 = vmatprep.subr.mxu0 0.0
    %158 = vmatpush1.msra.mxu0 0.0
    %159 = vmatprep.subr.mxu0 0.0
    %160 = vmatpush1.msra.mxu0 0.0
    %161 = vmatprep.subr.mxu0 0.0
    %162 = vmatpush1.msra.mxu0 0.0
    %163 = vmatprep.subr.mxu0 0.0
    %164 = vmatpush1.msra.mxu0 0.0
    %165 = vmatprep.subr.mxu0 0.0
    %166 = vmatpush1.msra.mxu0 0.0
    %167 = vmatprep.subr.mxu0 0.0
    %168 = vmatpush1.msra.mxu0 0.0
    %169 = vmatprep.subr.mxu0 0.0
    %170 = vmatpush1.msra.mxu0 0.0
    %171 = vmatprep.subr.mxu0 0.0
    %172 = vmatpush1.msra.mxu0 0.0
    %173 = vmatprep.subr.mxu0 0.0
    %174 = vmatpush1.msra.mxu0 0.0
    %175 = vmatprep.subr.mxu0 0.0
    %176 = vmatpush1.msra.mxu0 0.0
    %177 = vmatprep.subr.mxu0 0.0
    %178 = vmatpush1.msra.mxu0 0.0
    %179 = vmatprep.subr.mxu0 0.0
    %180 = vmatpush1.msra.mxu0 0.0
    %181 = vmatprep.subr.mxu0 0.0
    %182 = vmatpush1.msra.mxu0 0.0
    %183 = vmatprep.subr.mxu0 0.0
    %184 = vmatpush1.msra.mxu0 0.0
    %185 = vmatprep.subr.mxu0 0.0
    %186 = vmatpush1.msra.mxu0 0.0
    %187 = vmatprep.subr.mxu0 0.0
    %188 = vmatpush1.msra.mxu0 0.0
    %189 = vmatprep.subr.mxu0 0.0
    %190 = vmatpush1.msra.mxu0 0.0
    %191 = vmatprep.subr.mxu0 0.0
    %192 = vmatpush1.msra.mxu0 0.0
    %193 = vmatprep.mubr.f32.mxu0 0.0
    %194 = vmatmul.mubr.f32.gmra.mrb[0].mxu0 %v124
    %v195 = vpop.f32.mrb[0].mxu0
    %v196 = vadd.f32 0.0, %v195
    %v197 = vpop.f32.mrb[0].mxu0
    %v198 = vadd.f32 0.0, %v197
    %199 = vmatprep.mubr.f32.mxu0 0.0
    %200 = vmatmul.mubr.f32.gmra.mrb[0].mxu0 %v127
    %v201 = vpop.f32.mrb[0].mxu0
    %v202 = vadd.f32 0.0, %v201
    %v203 = vpop.f32.mrb[0].mxu0
    %v204 = vadd.f32 0.0, %v203
    %205 = vdwg.mxu0
    %206 = vmatprep.subr.mxu0 %v61
    %207 = vmatpush1.msra.mxu0 %v60
    %208 = vmatprep.subr.mxu0 %v69
    %209 = vmatpush1.msra.mxu0 %v68
    %210 = vmatprep.subr.mxu0 %v77
    %211 = vmatpush1.msra.mxu0 %v76
    %212 = vmatprep.subr.mxu0 %v85
    %213 = vmatpush1.msra.mxu0 %v84
    %214 = vmatprep.subr.mxu0 %v93
    %215 = vmatpush1.msra.mxu0 %v92
    %216 = vmatprep.subr.mxu0 %v101
    %217 = vmatpush1.msra.mxu0 %v100
    %218 = vmatprep.subr.mxu0 %v109
    %219 = vmatpush1.msra.mxu0 %v108
    %220 = vmatprep.subr.mxu0 %v117
    %221 = vmatpush1.msra.mxu0 %v116
    %222 = vmatprep.subr.mxu0 0.0
    %223 = vmatpush1.msra.mxu0 0.0
    %224 = vmatprep.subr.mxu0 0.0
    %225 = vmatpush1.msra.mxu0 0.0
    %226 = vmatprep.subr.mxu0 0.0
    %227 = vmatpush1.msra.mxu0 0.0
    %228 = vmatprep.subr.mxu0 0.0
    %229 = vmatpush1.msra.mxu0 0.0
    %230 = vmatprep.subr.mxu0 0.0
    %231 = vmatpush1.msra.mxu0 0.0
    %232 = vmatprep.subr.mxu0 0.0
    %233 = vmatpush1.msra.mxu0 0.0
    %234 = vmatprep.subr.mxu0 0.0
    %235 = vmatpush1.msra.mxu0 0.0
    %236 = vmatprep.subr.mxu0 0.0
    %237 = vmatpush1.msra.mxu0 0.0
    %238 = vmatprep.subr.mxu0 0.0
    %239 = vmatpush1.msra.mxu0 0.0
    %240 = vmatprep.subr.mxu0 0.0
    %241 = vmatpush1.msra.mxu0 0.0
    %242 = vmatprep.subr.mxu0 0.0
    %243 = vmatpush1.msra.mxu0 0.0
    %244 = vmatprep.subr.mxu0 0.0
    %245 = vmatpush1.msra.mxu0 0.0
    %246 = vmatprep.subr.mxu0 0.0
    %247 = vmatpush1.msra.mxu0 0.0
    %248 = vmatprep.subr.mxu0 0.0
    %249 = vmatpush1.msra.mxu0 0.0
    %250 = vmatprep.subr.mxu0 0.0
    %251 = vmatpush1.msra.mxu0 0.0
    %252 = vmatprep.subr.mxu0 0.0
    %253 = vmatpush1.msra.mxu0 0.0
    %254 = vmatprep.subr.mxu0 0.0
    %255 = vmatpush1.msra.mxu0 0.0
    %256 = vmatprep.subr.mxu0 0.0
    %257 = vmatpush1.msra.mxu0 0.0
    %258 = vmatprep.subr.mxu0 0.0
    %259 = vmatpush1.msra.mxu0 0.0
    %260 = vmatprep.subr.mxu0 0.0
    %261 = vmatpush1.msra.mxu0 0.0
    %262 = vmatprep.subr.mxu0 0.0
    %263 = vmatpush1.msra.mxu0 0.0
    %264 = vmatprep.subr.mxu0 0.0
    %265 = vmatpush1.msra.mxu0 0.0
    %266 = vmatprep.subr.mxu0 0.0
    %267 = vmatpush1.msra.mxu0 0.0
    %268 = vmatprep.subr.mxu0 0.0
    %269 = vmatpush1.msra.mxu0 0.0
    %270 = vmatprep.mubr.f32.mxu0 0.0
    %271 = vmatmul.mubr.f32.gmra.mrb[0].mxu0 %v124
    %v272 = vpop.f32.mrb[0].mxu0
    %v273 = vadd.f32 0.0, %v272
    %v274 = vpop.f32.mrb[0].mxu0
    %v275 = vadd.f32 0.0, %v274
    %276 = vmatprep.mubr.f32.mxu0 0.0
    %277 = vmatmul.mubr.f32.gmra.mrb[0].mxu0 %v127
    %v278 = vpop.f32.mrb[0].mxu0
    %v279 = vadd.f32 0.0, %v278
    %v280 = vpop.f32.mrb[0].mxu0
    %v281 = vadd.f32 0.0, %v280
    %282 = vdwg.mxu0
    %283 = vmatprep.subr.mxu0 %v63
    %284 = vmatpush1.msra.mxu0 %v62
    %285 = vmatprep.subr.mxu0 %v71
    %286 = vmatpush1.msra.mxu0 %v70
    %287 = vmatprep.subr.mxu0 %v79
    %288 = vmatpush1.msra.mxu0 %v78
    %289 = vmatprep.subr.mxu0 %v87
    %290 = vmatpush1.msra.mxu0 %v86
    %291 = vmatprep.subr.mxu0 %v95
    %292 = vmatpush1.msra.mxu0 %v94
    %293 = vmatprep.subr.mxu0 %v103
    %294 = vmatpush1.msra.mxu0 %v102
    %295 = vmatprep.subr.mxu0 %v111
    %296 = vmatpush1.msra.mxu0 %v110
    %297 = vmatprep.subr.mxu0 %v119
    %298 = vmatpush1.msra.mxu0 %v118
    %299 = vmatprep.subr.mxu0 0.0
    %300 = vmatpush1.msra.mxu0 0.0
    %301 = vmatprep.subr.mxu0 0.0
    %302 = vmatpush1.msra.mxu0 0.0
    %303 = vmatprep.subr.mxu0 0.0
    %304 = vmatpush1.msra.mxu0 0.0
    %305 = vmatprep.subr.mxu0 0.0
    %306 = vmatpush1.msra.mxu0 0.0
    %307 = vmatprep.subr.mxu0 0.0
    %308 = vmatpush1.msra.mxu0 0.0
    %309 = vmatprep.subr.mxu0 0.0
    %310 = vmatpush1.msra.mxu0 0.0
    %311 = vmatprep.subr.mxu0 0.0
    %312 = vmatpush1.msra.mxu0 0.0
    %313 = vmatprep.subr.mxu0 0.0
    %314 = vmatpush1.msra.mxu0 0.0
    %315 = vmatprep.subr.mxu0 0.0
    %316 = vmatpush1.msra.mxu0 0.0
    %317 = vmatprep.subr.mxu0 0.0
    %318 = vmatpush1.msra.mxu0 0.0
    %319 = vmatprep.subr.mxu0 0.0
    %320 = vmatpush1.msra.mxu0 0.0
    %321 = vmatprep.subr.mxu0 0.0
    %322 = vmatpush1.msra.mxu0 0.0
    %323 = vmatprep.subr.mxu0 0.0
    %324 = vmatpush1.msra.mxu0 0.0
    %325 = vmatprep.subr.mxu0 0.0
    %326 = vmatpush1.msra.mxu0 0.0
    %327 = vmatprep.subr.mxu0 0.0
    %328 = vmatpush1.msra.mxu0 0.0
    %329 = vmatprep.subr.mxu0 0.0
    %330 = vmatpush1.msra.mxu0 0.0
    %331 = vmatprep.subr.mxu0 0.0
    %332 = vmatpush1.msra.mxu0 0.0
    %333 = vmatprep.subr.mxu0 0.0
    %334 = vmatpush1.msra.mxu0 0.0
    %335 = vmatprep.subr.mxu0 0.0
    %336 = vmatpush1.msra.mxu0 0.0
    %337 = vmatprep.subr.mxu0 0.0
    %338 = vmatpush1.msra.mxu0 0.0
    %339 = vmatprep.subr.mxu0 0.0
    %340 = vmatpush1.msra.mxu0 0.0
    %341 = vmatprep.subr.mxu0 0.0
    %342 = vmatpush1.msra.mxu0 0.0
    %343 = vmatprep.subr.mxu0 0.0
    %344 = vmatpush1.msra.mxu0 0.0
    %345 = vmatprep.subr.mxu0 0.0
    %346 = vmatpush1.msra.mxu0 0.0
    %347 = vmatprep.mubr.f32.mxu0 0.0
    %348 = vmatmul.mubr.f32.gmra.mrb[0].mxu0 %v124
    %v349 = vpop.f32.mrb[0].mxu0
    %v350 = vadd.f32 0.0, %v349
    %v351 = vpop.f32.mrb[0].mxu0
    %v352 = vadd.f32 0.0, %v351
    %353 = vmatprep.mubr.f32.mxu0 0.0
    %354 = vmatmul.mubr.f32.gmra.mrb[0].mxu0 %v127
    %v355 = vpop.f32.mrb[0].mxu0
    %v356 = vadd.f32 0.0, %v355
    %v357 = vpop.f32.mrb[0].mxu0
    %v358 = vadd.f32 0.0, %v357
    %359 = vdwg.mxu0
    %360 = vmatprep.subr.mxu0 %v65
    %361 = vmatpush1.msra.mxu0 %v64
    %362 = vmatprep.subr.mxu0 %v73
    %363 = vmatpush1.msra.mxu0 %v72
    %364 = vmatprep.subr.mxu0 %v81
    %365 = vmatpush1.msra.mxu0 %v80
    %366 = vmatprep.subr.mxu0 %v89
    %367 = vmatpush1.msra.mxu0 %v88
    %368 = vmatprep.subr.mxu0 %v97
    %369 = vmatpush1.msra.mxu0 %v96
    %370 = vmatprep.subr.mxu0 %v105
    %371 = vmatpush1.msra.mxu0 %v104
    %372 = vmatprep.subr.mxu0 %v113
    %373 = vmatpush1.msra.mxu0 %v112
    %374 = vmatprep.subr.mxu0 %v121
    %375 = vmatpush1.msra.mxu0 %v120
    %376 = vmatprep.subr.mxu0 0.0
    %377 = vmatpush1.msra.mxu0 0.0
    %378 = vmatprep.subr.mxu0 0.0
    %379 = vmatpush1.msra.mxu0 0.0
    %380 = vmatprep.subr.mxu0 0.0
    %381 = vmatpush1.msra.mxu0 0.0
    %382 = vmatprep.subr.mxu0 0.0
    %383 = vmatpush1.msra.mxu0 0.0
    %384 = vmatprep.subr.mxu0 0.0
    %385 = vmatpush1.msra.mxu0 0.0
    %386 = vmatprep.subr.mxu0 0.0
    %387 = vmatpush1.msra.mxu0 0.0
    %388 = vmatprep.subr.mxu0 0.0
    %389 = vmatpush1.msra.mxu0 0.0
    %390 = vmatprep.subr.mxu0 0.0
    %391 = vmatpush1.msra.mxu0 0.0
    %392 = vmatprep.subr.mxu0 0.0
    %393 = vmatpush1.msra.mxu0 0.0
    %394 = vmatprep.subr.mxu0 0.0
    %395 = vmatpush1.msra.mxu0 0.0
    %396 = vmatprep.subr.mxu0 0.0
    %397 = vmatpush1.msra.mxu0 0.0
    %398 = vmatprep.subr.mxu0 0.0
    %399 = vmatpush1.msra.mxu0 0.0
    %400 = vmatprep.subr.mxu0 0.0
    %401 = vmatpush1.msra.mxu0 0.0
    %402 = vmatprep.subr.mxu0 0.0
    %403 = vmatpush1.msra.mxu0 0.0
    %404 = vmatprep.subr.mxu0 0.0
    %405 = vmatpush1.msra.mxu0 0.0
    %406 = vmatprep.subr.mxu0 0.0
    %407 = vmatpush1.msra.mxu0 0.0
    %408 = vmatprep.subr.mxu0 0.0
    %409 = vmatpush1.msra.mxu0 0.0
    %410 = vmatprep.subr.mxu0 0.0
    %411 = vmatpush1.msra.mxu0 0.0
    %412 = vmatprep.subr.mxu0 0.0
    %413 = vmatpush1.msra.mxu0 0.0
    %414 = vmatprep.subr.mxu0 0.0
    %415 = vmatpush1.msra.mxu0 0.0
    %416 = vmatprep.subr.mxu0 0.0
    %417 = vmatpush1.msra.mxu0 0.0
    %418 = vmatprep.subr.mxu0 0.0
    %419 = vmatpush1.msra.mxu0 0.0
    %420 = vmatprep.subr.mxu0 0.0
    %421 = vmatpush1.msra.mxu0 0.0
    %422 = vmatprep.subr.mxu0 0.0
    %423 = vmatpush1.msra.mxu0 0.0
    %424 = vmatprep.mubr.f32.mxu0 0.0
    %425 = vmatmul.mubr.f32.gmra.mrb[0].mxu0 %v124
    %v426 = vpop.f32.mrb[0].mxu0
    %v427 = vadd.f32 0.0, %v426
    %v428 = vpop.f32.mrb[0].mxu0
    %v429 = vadd.f32 0.0, %v428
    %430 = vmatprep.mubr.f32.mxu0 0.0
    %431 = vmatmul.mubr.f32.gmra.mrb[0].mxu0 %v127
    %v432 = vpop.f32.mrb[0].mxu0
    %v433 = vadd.f32 0.0, %v432
    %v434 = vpop.f32.mrb[0].mxu0
    %v435 = vadd.f32 0.0, %v434
    %436 = vdwg.mxu0
    %v437 = vld [vmem:[#allocation7] sm:$0xff]
    %v438 = vld [vmem:[#allocation7 + $0x8] sm:$0xff]
    %vm439 = vcmp.eq.s32.totalorder %v437, 0
    %vm440 = vcmp.eq.s32.totalorder %v438, 0
    %v441 = vsel %vm439, %v196, 0.0
    %v442 = vsel %vm440, %v202, 0.0
    %vm443 = vcmp.eq.s32.totalorder %v437, 1
    %vm444 = vcmp.eq.s32.totalorder %v438, 1
    %v445 = vsel %vm443, %v198, %v441
    %v446 = vsel %vm444, %v204, %v442
    %vm447 = vcmp.eq.s32.totalorder %v437, 2
    %vm448 = vcmp.eq.s32.totalorder %v438, 2
    %v449 = vsel %vm447, %v273, %v445
    %v450 = vsel %vm448, %v279, %v446
    %vm451 = vcmp.eq.s32.totalorder %v437, 3
    %vm452 = vcmp.eq.s32.totalorder %v438, 3
    %v453 = vsel %vm451, %v275, %v449
    %v454 = vsel %vm452, %v281, %v450
    %vm455 = vcmp.eq.s32.totalorder %v437, 4
    %vm456 = vcmp.eq.s32.totalorder %v438, 4
    %v457 = vsel %vm455, %v350, %v453
    %v458 = vsel %vm456, %v356, %v454
    %vm459 = vcmp.eq.s32.totalorder %v437, 5
    %vm460 = vcmp.eq.s32.totalorder %v438, 5
    %v461 = vsel %vm459, %v352, %v457
    %v462 = vsel %vm460, %v358, %v458
    %vm463 = vcmp.eq.s32.totalorder %v437, 6
    %vm464 = vcmp.eq.s32.totalorder %v438, 6
    %v465 = vsel %vm463, %v427, %v461
    %v466 = vsel %vm464, %v433, %v462
    %vm467 = vcmp.eq.s32.totalorder %v437, 7
    %vm468 = vcmp.eq.s32.totalorder %v438, 7
    %v469 = vsel %vm467, %v429, %v465
    %v470 = vsel %vm468, %v435, %v466
    %471 = vst [vmem:[#allocation8] sm:$0xff] %v469
    %472 = vst [vmem:[#allocation8 + $0x8] sm:$0xff] %v470
    // Predicated region
    $region26: #{tpu_custom_call.1} parent=1 // pred_check
      _
    $region27: #{tpu_custom_call.1} parent=1 // pred_check_branch
      %474 = sbr.rel (0) target = $region29
    $region28: #{tpu_custom_call.1} parent=1 // pred_region
      %s476 = ssub.s32 256, 256
      %477 = vsyncadd [#allocation4], %s476
      %s478 = sshll.u32 [#allocation8], 4
      %s479 = int_to_ptr.vmem [resolvable:$true] %s478
      %484 = dma.vmem_to_hbm [thread:$0]  %s479, 256, %s3, [#allocation4], 128, 128, 8
    $region29: #{tpu_custom_call.1} parent=1 // pred_fallthru
      _
    // Predicated region
    $region30: #{tpu_custom_call.1} parent=1 // pred_check
      _
    $region31: #{tpu_custom_call.1} parent=1 // pred_check_branch
      %486 = sbr.rel (0) target = $region33
    $region32: #{tpu_custom_call.1} parent=1 // pred_region
      %487 = dma.done [#allocation4], 256
    $region33: #{tpu_custom_call.1} parent=1 // pred_fallthru
      _
    %488 = vsyncpa [#allocation3], 1
    %489 = vsyncpa [#allocation6], 1
    %490 = vsyncpa [#allocation4], 1

</llo_original>
